<compile_context>
chip_gen: v7x
topology: tpu7x:2x2x1
jax: 0.10.0
libtpu: 0.0.40
codegen_flags: <defaults>
</compile_context>

<pallas_src>
import functools

import jax
import jax.numpy as jnp
from jax.experimental import pallas as pl
from jax.experimental.pallas import tpu as pltpu


def mca_gate_kernel(coef_ref, w_ref, chan_ref, x_ref, o_ref, pp_ref, *,
                    channels, pad_rows):
    # coef_ref: SMEM (2,)  f32  -> (0.5 + sigmoid(w0), 0.5 + sigmoid(w1))
    # w_ref:    SMEM (k,)  f32  -> 1xk conv weights (cross-correlation, zero padded)
    # chan_ref: VMEM (R,1) i32  -> channel index of each row (row = b*C + c)
    # x_ref:    VMEM (R,HW)     -> R = Bt*C rows of spatial data (lane axis = HW)
    # pp_ref:   VMEM (R+2*pad_rows, 1) f32 scratch: zero-padded pooled vector
    x = x_ref[...].astype(jnp.float32)                      # (R, HW)
    rows, hw = x.shape
    k_size = w_ref.shape[0]
    pad = (k_size - 1) // 2

    # ---- one-pass pooling statistics (lane-axis reductions, no (x-mean) temp) ----
    s1 = jnp.sum(x, axis=-1, keepdims=True)                 # (R, 1)
    s2 = jnp.sum(x * x, axis=-1, keepdims=True)             # (R, 1)
    mean = s1 * (1.0 / hw)                                  # AdaptiveAvgPool2d(1)
    # Unbiased variance (torch .std() default). Clamp tiny negatives from the
    # E[x^2]-E[x]^2 cancellation.  NOTE: hw == 1 gives NaN, same as torch.std(unbiased).
    var = jnp.maximum((s2 - hw * mean * mean) / (hw - 1), 0.0)
    std = jnp.sqrt(var)                                     # StdPool

    # ---- weighted combination: (0.5+sig(w0))*avg + (0.5+sig(w1))*std ----
    pooled = coef_ref[0] * mean + coef_ref[1] * std         # (R, 1)

    # ---- 1xk conv across channels via shifted reads of a zero-padded staging buffer ----
    pp_ref[...] = jnp.zeros_like(pp_ref)
    pp_ref[pad_rows:pad_rows + rows, :] = pooled
    ch = chan_ref[...]                                      # (R, 1) channel index in [0, C)
    conv = jnp.zeros_like(pooled)
    for t in range(k_size):                                 # k is tiny & static
        d = t - pad
        shifted = pp_ref[pad_rows + d:pad_rows + d + rows, :]   # pooled[row + d] (0 outside)
        if d == 0:
            contrib = shifted
        else:
            # zero padding at every image's channel edges (also kills cross-batch rows)
            valid = (ch + d >= 0) & (ch + d < channels)
            contrib = jnp.where(valid, shifted, 0.0)
        conv = conv + w_ref[t] * contrib

    scale = 1.0 / (1.0 + jnp.exp(-conv))                    # sigmoid, (R, 1)

    # ---- gate: x * scale (broadcast over the spatial/lane axis) ----
    o_ref[...] = (x * scale).astype(o_ref.dtype)


def _pick_batch_tile(b, c, hw, itemsize, budget_bytes):
    """Largest divisor of b whose block (in + out, double-buffered) fits the VMEM budget,
    keeping >= 2 grid steps when b >= 2 so both v7x TensorCores get work."""
    best = 1
    for d in range(1, b + 1):
        if b % d:
            continue
        if 4 * d * c * hw * itemsize > budget_bytes:        # 2 buffers x (in + out)
            continue
        if b >= 2 and b // d < 2:
            continue
        best = d
    return best


def mca_gate(x_nchw, conv_w, gate_w, k_size):
    """x_nchw: (B, C, H, W).  conv_w: (k_size,) conv weight.  gate_w: (2,) gate param."""
    B, C, H, W = x_nchw.shape
    HW = H * W
    pad = (k_size - 1) // 2
    pad_rows = max(8, ((pad + 7) // 8) * 8)     # 8-aligned zero-pad band in the scratch

    # tiny parameter preprocessing in plain JAX
    sw = jax.nn.sigmoid(gate_w.astype(jnp.float32))
    coefs = (0.5 + sw).astype(jnp.float32)                          # (2,)
    w = conv_w.astype(jnp.float32).reshape(k_size)                  # (k,)

    # free reshapes only -- no HBM transpose passes
    x2 = x_nchw.reshape(B * C, HW)
    chan = (jnp.arange(B * C, dtype=jnp.int32) % C).reshape(B * C, 1)

    itemsize = x_nchw.dtype.itemsize
    if C % 8 != 0:
        bt = B          # block rows must be 8-aligned unless they span the full dim
    else:
        bt = _pick_batch_tile(B, C, HW, itemsize, budget_bytes=12 * 1024 * 1024)
    # TODO(synk): for a single huge image (B == 1 with C*HW bigger than the VMEM budget)
    # add an HW grid axis with pl.when init/finalize to split the stats/gate passes.
    rows = bt * C
    grid = (B // bt,)

    out2 = pl.pallas_call(
        functools.partial(mca_gate_kernel, channels=C, pad_rows=pad_rows),
        out_shape=jax.ShapeDtypeStruct((B * C, HW), x_nchw.dtype),
        grid_spec=pltpu.PrefetchScalarGridSpec(
            num_scalar_prefetch=0,
            grid=grid,
            in_specs=[
                pl.BlockSpec(memory_space=pltpu.MemorySpace.SMEM),   # coefs (2,)
                pl.BlockSpec(memory_space=pltpu.MemorySpace.SMEM),   # conv weights (k,)
                pl.BlockSpec((rows, 1), lambda i: (i, 0)),           # channel index
                pl.BlockSpec((rows, HW), lambda i: (i, 0)),          # x rows
            ],
            out_specs=pl.BlockSpec((rows, HW), lambda i: (i, 0)),
            scratch_shapes=[pltpu.VMEM((rows + 2 * pad_rows, 1), jnp.float32)],
        ),
        compiler_params=pltpu.CompilerParams(
            dimension_semantics=("parallel",),
            vmem_limit_bytes=32 * 1024 * 1024,
        ),
    )(coefs, w, chan, x2)

    return out2.reshape(B, C, H, W)


def mca_gate_reference(x, conv_w, gate_w, k_size):
    """Pure-JAX reference mirroring the PyTorch forward."""
    B, C, H, W = x.shape
    pad = (k_size - 1) // 2
    flat = x.reshape(B, C, -1)
    avg = flat.mean(axis=-1)                                # (B, C)
    std = flat.std(axis=-1, ddof=1)                         # unbiased, like torch
    sw = jax.nn.sigmoid(gate_w)
    pooled = 0.5 * (avg + std) + sw[0] * avg + sw[1] * std  # (B, C)
    pp = jnp.pad(pooled, ((0, 0), (pad, pad)))
    conv = sum(conv_w[t] * pp[:, t:t + C] for t in range(k_size))
    scale = jax.nn.sigmoid(conv)[:, :, None, None]
    return x * scale


if __name__ == "__main__":
    key = jax.random.PRNGKey(0)
    k_x, k_conv, k_gate = jax.random.split(key, 3)

    B, C, H, W = 2, 128, 16, 16
    k_size = 3

    x = jax.random.uniform(k_x, (B, C, H, W), dtype=jnp.float32)
    # deterministic parameter init (torch.rand -> uniform [0, 1))
    conv_w = jax.random.uniform(k_conv, (k_size,), dtype=jnp.float32)  # Conv2d(1,1,(1,k)).weight
    gate_w = jax.random.uniform(k_gate, (2,), dtype=jnp.float32)       # nn.Parameter(torch.rand(2))

    out = mca_gate(x, conv_w, gate_w, k_size)
    out = jax.block_until_ready(out)

    ref = mca_gate_reference(x, conv_w, gate_w, k_size)
    assert out.shape == x.shape
    assert jnp.allclose(out, ref, rtol=1e-4, atol=1e-5), "mismatch vs reference"

    print("KERNEL_OK")
</pallas_src>

<mosaic_0001>
module attributes {stable_mosaic.version = 11 : i64} {
  func.func @mca_gate_kernel(%arg0: i32, %arg1: memref<2xf32, #tpu.memory_space<smem>>, %arg2: memref<3xf32, #tpu.memory_space<smem>>, %arg3: memref<128x1xi32, #tpu.memory_space<vmem>>, %arg4: memref<128x256xf32, #tpu.memory_space<vmem>>, %arg5: memref<128x256xf32, #tpu.memory_space<vmem>>, %arg6: memref<144x1xf32, #tpu.memory_space<vmem>>) attributes {dimension_semantics = [#tpu.dimension_semantics<parallel>], iteration_bounds = array<i64: 2>, scalar_prefetch = 0 : i64, scratch_operands = 1 : i64, tpu.core_type = #tpu.core_type<tc>, window_params = [{transform_indices = @transform_0, window_bounds = array<i64: 2>}, {transform_indices = @transform_1, window_bounds = array<i64: 3>}, {transform_indices = @transform_2, window_bounds = array<i64: 128, 1>}, {transform_indices = @transform_3, window_bounds = array<i64: 128, 256>}, {transform_indices = @transform_4, window_bounds = array<i64: 128, 256>}]} {
    %c0 = arith.constant 0 : index
    %c0_0 = arith.constant 0 : index
    %0 = vector.load %arg4[%c0, %c0_0] : memref<128x256xf32, #tpu.memory_space<vmem>>, vector<128x256xf32>
    %cst = arith.constant dense<0.000000e+00> : vector<128xf32>
    %1 = vector.multi_reduction <add>, %0, %cst [1] : vector<128x256xf32> to vector<128xf32>
    %2 = vector.shape_cast %1 : vector<128xf32> to vector<128x1xf32>
    %3 = arith.mulf %0, %0 : vector<128x256xf32>
    %cst_1 = arith.constant dense<0.000000e+00> : vector<128xf32>
    %4 = vector.multi_reduction <add>, %3, %cst_1 [1] : vector<128x256xf32> to vector<128xf32>
    %5 = vector.shape_cast %4 : vector<128xf32> to vector<128x1xf32>
    %cst_2 = arith.constant 3.906250e-03 : f32
    %6 = vector.broadcast %cst_2 : f32 to vector<128x1xf32>
    %7 = arith.mulf %2, %6 : vector<128x1xf32>
    %cst_3 = arith.constant 2.560000e+02 : f32
    %8 = vector.broadcast %cst_3 : f32 to vector<128x1xf32>
    %9 = arith.mulf %8, %7 : vector<128x1xf32>
    %10 = arith.mulf %9, %7 : vector<128x1xf32>
    %11 = arith.subf %5, %10 : vector<128x1xf32>
    %cst_4 = arith.constant 2.550000e+02 : f32
    %12 = vector.broadcast %cst_4 : f32 to vector<128x1xf32>
    %13 = arith.divf %11, %12 : vector<128x1xf32>
    %cst_5 = arith.constant 0.000000e+00 : f32
    %14 = vector.broadcast %cst_5 : f32 to vector<128x1xf32>
    %15 = arith.maximumf %13, %14 : vector<128x1xf32>
    %16 = math.sqrt %15 : vector<128x1xf32>
    %c0_6 = arith.constant 0 : index
    %17 = memref.load %arg1[%c0_6] : memref<2xf32, #tpu.memory_space<smem>>
    %18 = vector.broadcast %17 : f32 to vector<128x1xf32>
    %19 = arith.mulf %18, %7 : vector<128x1xf32>
    %c1 = arith.constant 1 : index
    %20 = memref.load %arg1[%c1] : memref<2xf32, #tpu.memory_space<smem>>
    %21 = vector.broadcast %20 : f32 to vector<128x1xf32>
    %22 = arith.mulf %21, %16 : vector<128x1xf32>
    %23 = arith.addf %19, %22 : vector<128x1xf32>
    %cst_7 = arith.constant 0.000000e+00 : f32
    %24 = vector.broadcast %cst_7 : f32 to vector<144x1xf32>
    %c0_8 = arith.constant 0 : index
    %c0_9 = arith.constant 0 : index
    %25 = vector.load %arg6[%c0_8, %c0_9] : memref<144x1xf32, #tpu.memory_space<vmem>>, vector<144x1xf32>
    tpu.vector_store %arg6[%c0_8, %c0_9], %24 {strides = array<i32>} : memref<144x1xf32, #tpu.memory_space<vmem>>, vector<144x1xf32>,
    %c8 = arith.constant 8 : index
    %c0_10 = arith.constant 0 : index
    %26 = vector.load %arg6[%c8, %c0_10] : memref<144x1xf32, #tpu.memory_space<vmem>>, vector<128x1xf32>
    tpu.vector_store %arg6[%c8, %c0_10], %23 {strides = array<i32>} : memref<144x1xf32, #tpu.memory_space<vmem>>, vector<128x1xf32>,
    %c0_11 = arith.constant 0 : index
    %c0_12 = arith.constant 0 : index
    %27 = vector.load %arg3[%c0_11, %c0_12] : memref<128x1xi32, #tpu.memory_space<vmem>>, vector<128x1xi32>
    %cst_13 = arith.constant 0.000000e+00 : f32
    %28 = vector.broadcast %cst_13 : f32 to vector<128x1xf32>
    %c7 = arith.constant 7 : index
    %c0_14 = arith.constant 0 : index
    %29 = vector.load %arg6[%c7, %c0_14] : memref<144x1xf32, #tpu.memory_space<vmem>>, vector<128x1xf32>
    %c-1_i32 = arith.constant -1 : i32
    %30 = vector.broadcast %c-1_i32 : i32 to vector<128x1xi32>
    %31 = arith.addi %27, %30 : vector<128x1xi32>
    %c0_i32 = arith.constant 0 : i32
    %32 = vector.broadcast %c0_i32 : i32 to vector<128x1xi32>
    %33 = arith.cmpi sge, %31, %32 : vector<128x1xi32>
    %c-1_i32_15 = arith.constant -1 : i32
    %34 = vector.broadcast %c-1_i32_15 : i32 to vector<128x1xi32>
    %35 = arith.addi %27, %34 : vector<128x1xi32>
    %c128_i32 = arith.constant 128 : i32
    %36 = vector.broadcast %c128_i32 : i32 to vector<128x1xi32>
    %37 = arith.cmpi slt, %35, %36 : vector<128x1xi32>
    %38 = arith.andi %33, %37 : vector<128x1xi1>
    %cst_16 = arith.constant 0.000000e+00 : f32
    %39 = vector.broadcast %cst_16 : f32 to vector<128x1xf32>
    %40 = arith.select %38, %29, %39 : vector<128x1xi1>, vector<128x1xf32>
    %c0_17 = arith.constant 0 : index
    %41 = memref.load %arg2[%c0_17] : memref<3xf32, #tpu.memory_space<smem>>
    %42 = vector.broadcast %41 : f32 to vector<128x1xf32>
    %43 = arith.mulf %42, %40 : vector<128x1xf32>
    %44 = arith.addf %28, %43 : vector<128x1xf32>
    %c8_18 = arith.constant 8 : index
    %c0_19 = arith.constant 0 : index
    %45 = vector.load %arg6[%c8_18, %c0_19] : memref<144x1xf32, #tpu.memory_space<vmem>>, vector<128x1xf32>
    %c1_20 = arith.constant 1 : index
    %46 = memref.load %arg2[%c1_20] : memref<3xf32, #tpu.memory_space<smem>>
    %47 = vector.broadcast %46 : f32 to vector<128x1xf32>
    %48 = arith.mulf %47, %45 : vector<128x1xf32>
    %49 = arith.addf %44, %48 : vector<128x1xf32>
    %c9 = arith.constant 9 : index
    %c0_21 = arith.constant 0 : index
    %50 = vector.load %arg6[%c9, %c0_21] : memref<144x1xf32, #tpu.memory_space<vmem>>, vector<128x1xf32>
    %c1_i32 = arith.constant 1 : i32
    %51 = vector.broadcast %c1_i32 : i32 to vector<128x1xi32>
    %52 = arith.addi %27, %51 : vector<128x1xi32>
    %c0_i32_22 = arith.constant 0 : i32
    %53 = vector.broadcast %c0_i32_22 : i32 to vector<128x1xi32>
    %54 = arith.cmpi sge, %52, %53 : vector<128x1xi32>
    %c1_i32_23 = arith.constant 1 : i32
    %55 = vector.broadcast %c1_i32_23 : i32 to vector<128x1xi32>
    %56 = arith.addi %27, %55 : vector<128x1xi32>
    %c128_i32_24 = arith.constant 128 : i32
    %57 = vector.broadcast %c128_i32_24 : i32 to vector<128x1xi32>
    %58 = arith.cmpi slt, %56, %57 : vector<128x1xi32>
    %59 = arith.andi %54, %58 : vector<128x1xi1>
    %cst_25 = arith.constant 0.000000e+00 : f32
    %60 = vector.broadcast %cst_25 : f32 to vector<128x1xf32>
    %61 = arith.select %59, %50, %60 : vector<128x1xi1>, vector<128x1xf32>
    %c2 = arith.constant 2 : index
    %62 = memref.load %arg2[%c2] : memref<3xf32, #tpu.memory_space<smem>>
    %63 = vector.broadcast %62 : f32 to vector<128x1xf32>
    %64 = arith.mulf %63, %61 : vector<128x1xf32>
    %65 = arith.addf %49, %64 : vector<128x1xf32>
    %cst_26 = arith.constant 0.000000e+00 : f32
    %66 = vector.broadcast %cst_26 : f32 to vector<128x1xf32>
    %67 = arith.subf %66, %65 : vector<128x1xf32>
    %68 = math.exp %67 : vector<128x1xf32>
    %cst_27 = arith.constant 1.000000e+00 : f32
    %69 = vector.broadcast %cst_27 : f32 to vector<128x1xf32>
    %70 = arith.addf %69, %68 : vector<128x1xf32>
    %cst_28 = arith.constant 1.000000e+00 : f32
    %71 = vector.broadcast %cst_28 : f32 to vector<128x1xf32>
    %72 = arith.divf %71, %70 : vector<128x1xf32>
    %73 = vector.broadcast %72 : vector<128x1xf32> to vector<128x256xf32>
    %74 = arith.mulf %0, %73 : vector<128x256xf32>
    %c0_29 = arith.constant 0 : index
    %c0_30 = arith.constant 0 : index
    %75 = vector.load %arg5[%c0_29, %c0_30] : memref<128x256xf32, #tpu.memory_space<vmem>>, vector<128x256xf32>
    tpu.vector_store %arg5[%c0_29, %c0_30], %74 {strides = array<i32>} : memref<128x256xf32, #tpu.memory_space<vmem>>, vector<128x256xf32>,
    return
  }
  func.func @transform_0(%arg0: i32) -> i32 {
    %c0_i32 = arith.constant 0 : i32
    %c0_i32_0 = arith.constant 0 : i32
    return %c0_i32 : i32
  }
  func.func @transform_1(%arg0: i32) -> i32 {
    %c0_i32 = arith.constant 0 : i32
    %c0_i32_0 = arith.constant 0 : i32
    return %c0_i32 : i32
  }
  func.func @transform_2(%arg0: i32) -> (i32, i32) {
    %c0_i32 = arith.constant 0 : i32
    %c0_i32_0 = arith.constant 0 : i32
    return %arg0, %c0_i32 : i32, i32
  }
  func.func @transform_3(%arg0: i32) -> (i32, i32) {
    %c0_i32 = arith.constant 0 : i32
    %c0_i32_0 = arith.constant 0 : i32
    return %arg0, %c0_i32 : i32, i32
  }
  func.func @transform_4(%arg0: i32) -> (i32, i32) {
    %c0_i32 = arith.constant 0 : i32
    %c0_i32_0 = arith.constant 0 : i32
    return %arg0, %c0_i32 : i32, i32
  }
}

</mosaic_0001>

<llo_original>
// kernel: tpu_custom_call.1
$region0: #{tpu_custom_call.1}
  #allocation0 [shape = 'u32[]', space=smem, size = 0x4, offset = 0x4, fixed_abs, tag = 'smem constant byte address 0x4 - core index']
  #allocation1 [shape = 'u32[144,128]{1,0:T(1,128)}', space=vmem, size = 0x12000, scoped, tag = 'internal scratch']
  #allocation2 [shape = 'f32[144,1]{1,0:T(8,128)}', space=vmem, size = 0x12000, scoped, tag = 'scratch operand']
  %s0 = inlined_call_operand.vmem [shape: f32[2], index: 0, kind: input, shape index: {}]
  %s1 = inlined_call_operand.vmem [shape: f32[3], index: 1, kind: input, shape index: {}]
  %s2 = inlined_call_operand.vmem [shape: s32[256,1], index: 2, kind: input, shape index: {}]
  %s3 = inlined_call_operand.hbm [shape: f32[256,256], index: 3, kind: input, shape index: {}]
  %s4 = inlined_call_operand.hbm [shape: f32[256,256], index: 4, kind: output, shape index: {}]
  %s5 = sld [smem:[#allocation0]]
  $region61: #{tpu_custom_call.1} parent=0
    _
  %s7 = ssub.s32 1, %s5
  %s8 = scalar_select 0, %s7, %s5
  $region1: #{tpu_custom_call.1} parent=0
    #allocation3 [shape = 'u8[512]{0}', space=smem, size = 0x200, scoped, tag = 'input window, operand 0, single buffered']
    #allocation4 [shape = 's32[2]{0}', space=sflag, size = 0x8, scoped, tag = 'scoped memory for tpu_custom_call.1']
    #allocation5 [shape = 's32[2]{0}', space=sflag, size = 0x8, scoped, tag = 'scoped memory for tpu_custom_call.1']
    #allocation6 [shape = 's32[2]{0}', space=sflag, size = 0x8, scoped, tag = 'scoped memory for tpu_custom_call.1']
    #allocation7 [shape = 'u8[512]{0}', space=smem, size = 0x200, scoped, tag = 'input window, operand 1, single buffered']
    #allocation8 [shape = 's32[1]{0}', space=sflag, size = 0x4, scoped, tag = 'scoped memory for tpu_custom_call.1']
    #allocation9 [shape = 'u8[262144]{0}', space=vmem, size = 0x40000, scoped, tag = 'input window, operand 3']
    #allocation10 [shape = 'u8[262144]{0}', space=vmem, size = 0x40000, scoped, tag = 'output window, operand 0']
    %9 = vsyncpa [#allocation6], 0
    %10 = vsyncpa [#allocation8], 0
    %11 = vsyncpa [#allocation4], 0
    %s12 = scalar_lea.sflag [#allocation4], 1
    %13 = vsyncpa %s12, 0
    %14 = vsyncpa [#allocation5], 0
    %s15 = scalar_lea.sflag [#allocation5], 1
    %16 = vsyncpa %s15, 0
    loop: start=0, step=1, limit=4
    $region2: #{tpu_custom_call.1} parent=1 // loop_pre_header
      _
    $region3: #{tpu_custom_call.1} parent=1 // loop_header
      %s18 = sphi 0, %s22
      %p19 = scmp.ge.s32.totalorder %s18, 4
      %s26 = sphi 0, %s26
      %s28 = sphi 0, %s26
      %s29 = sphi 0, %s28
      %s43 = sphi 0, %s29
      %s47 = sphi 0, %s47
      %s49 = sphi 0, %s47
      %s50 = sphi 0, %s49
      %s64 = sphi 0, %s50
      %s70 = sphi 0, %s72
      %s73 = sphi 0, %s70
      %s74 = sphi 0, %s73
      %s90 = sphi 0, %s74
      %s96 = sphi 0, %s98
      %s99 = sphi 0, %s96
      %s100 = sphi 0, %s99
      %s116 = sphi 0, %s100
      %s122 = sphi 0, %s124
      %s125 = sphi 0, %s122
      %s126 = sphi 0, %s125
      %s142 = sphi 0, %s126
    $region4: #{tpu_custom_call.1} parent=1 // loop_header_branch
      %21 = sbr.rel (%p19) target = $region8
    $region5: #{tpu_custom_call.1} parent=1 // loop_body
      %s23 = ssub.s32 %s18, 1
      %s24 = ssub.s32 %s18, 2
      %s25 = sadd.s32 %s18, 1
      %s27 = sadd.s32 %s26, 1
      %p30 = scmp.eq.s32.totalorder %s18, 1
      %p31 = scmp.ne.s32.totalorder %s26, %s28
      %p32 = scmp.eq.s32.totalorder %s18, 0
      %p33 = por %p31, %p32
      %p34 = scmp.ne.s32.totalorder %s26, %s28
      %p35 = scmp.eq.s32.totalorder %s23, 1
      %p36 = por %p34, %p35
      %p37 = scmp.ne.s32.totalorder %s28, %s29
      %p38 = scmp.eq.s32.totalorder %s23, 0
      %p39 = por %p37, %p38
      %p40 = scmp.ne.s32.totalorder %s28, %s29
      %p41 = scmp.eq.s32.totalorder %s24, 1
      %p42 = por %p40, %p41
      %p44 = scmp.ne.s32.totalorder %s29, %s43
      %p45 = scmp.eq.s32.totalorder %s24, 0
      %p46 = por %p44, %p45
      %s48 = sadd.s32 %s47, 1
      %p51 = scmp.eq.s32.totalorder %s18, 1
      %p52 = scmp.ne.s32.totalorder %s47, %s49
      %p53 = scmp.eq.s32.totalorder %s18, 0
      %p54 = por %p52, %p53
      %p55 = scmp.ne.s32.totalorder %s47, %s49
      %p56 = scmp.eq.s32.totalorder %s23, 1
      %p57 = por %p55, %p56
      %p58 = scmp.ne.s32.totalorder %s49, %s50
      %p59 = scmp.eq.s32.totalorder %s23, 0
      %p60 = por %p58, %p59
      %p61 = scmp.ne.s32.totalorder %s49, %s50
      %p62 = scmp.eq.s32.totalorder %s24, 1
      %p63 = por %p61, %p62
      %p65 = scmp.ne.s32.totalorder %s50, %s64
      %p66 = scmp.eq.s32.totalorder %s24, 0
      %p67 = por %p65, %p66
      %s68 = ssub.s32 %s18, %s25
      %p69 = scmp.eq.s32.totalorder %s68, 0
      %s71 = sadd.s32 %s70, 1
      %s72 = scalar_select %p69, %s70, %s71
      %p75 = pneg %p69
      %p76 = scmp.eq.s32.totalorder %s18, 1
      %p77 = por %p75, %p76
      %p78 = scmp.ne.s32.totalorder %s70, %s73
      %p79 = scmp.eq.s32.totalorder %s18, 0
      %p80 = por %p78, %p79
      %p81 = scmp.ne.s32.totalorder %s70, %s73
      %p82 = scmp.eq.s32.totalorder %s23, 1
      %p83 = por %p81, %p82
      %p84 = scmp.ne.s32.totalorder %s73, %s74
      %p85 = scmp.eq.s32.totalorder %s23, 0
      %p86 = por %p84, %p85
      %p87 = scmp.ne.s32.totalorder %s73, %s74
      %p88 = scmp.eq.s32.totalorder %s24, 1
      %p89 = por %p87, %p88
      %p91 = scmp.ne.s32.totalorder %s74, %s90
      %p92 = scmp.eq.s32.totalorder %s24, 0
      %p93 = por %p91, %p92
      %s94 = ssub.s32 %s18, %s25
      %p95 = scmp.eq.s32.totalorder %s94, 0
      %s97 = sadd.s32 %s96, 1
      %s98 = scalar_select %p95, %s96, %s97
      %p101 = pneg %p95
      %p102 = scmp.eq.s32.totalorder %s18, 1
      %p103 = por %p101, %p102
      %p104 = scmp.ne.s32.totalorder %s96, %s99
      %p105 = scmp.eq.s32.totalorder %s18, 0
      %p106 = por %p104, %p105
      %p107 = scmp.ne.s32.totalorder %s96, %s99
      %p108 = scmp.eq.s32.totalorder %s23, 1
      %p109 = por %p107, %p108
      %p110 = scmp.ne.s32.totalorder %s99, %s100
      %p111 = scmp.eq.s32.totalorder %s23, 0
      %p112 = por %p110, %p111
      %p113 = scmp.ne.s32.totalorder %s99, %s100
      %p114 = scmp.eq.s32.totalorder %s24, 1
      %p115 = por %p113, %p114
      %p117 = scmp.ne.s32.totalorder %s100, %s116
      %p118 = scmp.eq.s32.totalorder %s24, 0
      %p119 = por %p117, %p118
      %s120 = ssub.s32 %s18, %s25
      %p121 = scmp.eq.s32.totalorder %s120, 0
      %s123 = sadd.s32 %s122, 1
      %s124 = scalar_select %p121, %s122, %s123
      %p127 = pneg %p121
      %p128 = scmp.eq.s32.totalorder %s18, 1
      %p129 = por %p127, %p128
      %p130 = scmp.ne.s32.totalorder %s122, %s125
      %p131 = scmp.eq.s32.totalorder %s18, 0
      %p132 = por %p130, %p131
      %p133 = scmp.ne.s32.totalorder %s122, %s125
      %p134 = scmp.eq.s32.totalorder %s23, 1
      %p135 = por %p133, %p134
      %p136 = scmp.ne.s32.totalorder %s125, %s126
      %p137 = scmp.eq.s32.totalorder %s23, 0
      %p138 = por %p136, %p137
      %p139 = scmp.ne.s32.totalorder %s125, %s126
      %p140 = scmp.eq.s32.totalorder %s24, 1
      %p141 = por %p139, %p140
      %p143 = scmp.ne.s32.totalorder %s126, %s142
      %p144 = scmp.eq.s32.totalorder %s24, 0
      %p145 = por %p143, %p144
      %p146 = scmp.le.s32.totalorder 1, %s18
      %p147 = scmp.lt.s32.totalorder %s18, 3
      %p148 = pnand %p146, %p147
      %p149 = pneg %p148
      // Predicated region
      $region9: #{tpu_custom_call.1} parent=5 // pred_check
        _
      $region10: #{tpu_custom_call.1} parent=5 // pred_check_branch
        %151 = sbr.rel (%p148) target = $region12
      $region11: #{tpu_custom_call.1} parent=5 // pred_region
        %s152 = ssub.s32 %s18, 1
        // Predicated region
        $region13: #{tpu_custom_call.1} parent=11 // pred_check
          %p153 = pneg %p39
        $region14: #{tpu_custom_call.1} parent=11 // pred_check_branch
          %155 = sbr.rel (%p153) target = $region16
        $region15: #{tpu_custom_call.1} parent=11 // pred_region
          %s157 = ssub.s32 16, 16
          %158 = vsyncadd [#allocation6], %s157
          %s160 = sshll.u32 %s0, 4
          %s161 = int_to_ptr.vmem [resolvable:$true] %s160
          %163 = dma.vmem_to_smem %s161, 16, [#allocation3], [#allocation6]
        $region16: #{tpu_custom_call.1} parent=11 // pred_fallthru
          _
        // Predicated region
        $region17: #{tpu_custom_call.1} parent=11 // pred_check
          %p164 = pneg %p60
        $region18: #{tpu_custom_call.1} parent=11 // pred_check_branch
          %166 = sbr.rel (%p164) target = $region20
        $region19: #{tpu_custom_call.1} parent=11 // pred_region
          %s168 = ssub.s32 16, 16
          %169 = vsyncadd [#allocation8], %s168
          %s171 = sshll.u32 %s1, 4
          %s172 = int_to_ptr.vmem [resolvable:$true] %s171
          %174 = dma.vmem_to_smem %s172, 16, [#allocation7], [#allocation8]
        $region20: #{tpu_custom_call.1} parent=11 // pred_fallthru
          _
      $region12: #{tpu_custom_call.1} parent=5 // pred_fallthru
        _
      %p175 = scmp.lt.s32.totalorder %s18, 2
      // Predicated region
      $region21: #{tpu_custom_call.1} parent=5 // pred_check
        %p176 = pneg %p175
      $region22: #{tpu_custom_call.1} parent=5 // pred_check_branch
        %178 = sbr.rel (%p176) target = $region24
      $region23: #{tpu_custom_call.1} parent=5 // pred_region
        // Predicated region
        $region25: #{tpu_custom_call.1} parent=23 // pred_check
          %p179 = pneg %p80
        $region26: #{tpu_custom_call.1} parent=23 // pred_check_branch
          %181 = sbr.rel (%p179) target = $region28
        $region27: #{tpu_custom_call.1} parent=23 // pred_region
          %s182 = smul.u32 16, %s18
          %p183 = scmp.lt.s32.totalorder %s182, 31
          %s184 = scalar_select %p183, %s182, 31
          %s185 = smul.addr %s184, 8
          %s186 = scalar_lea.vmem %s2, %s185
          %s187 = smul.u32 16, %s18
        $region28: #{tpu_custom_call.1} parent=23 // pred_fallthru
          _
        // Predicated region
        $region29: #{tpu_custom_call.1} parent=23 // pred_check
          %p188 = pneg %p106
        $region30: #{tpu_custom_call.1} parent=23 // pred_check_branch
          %190 = sbr.rel (%p188) target = $region32
        $region31: #{tpu_custom_call.1} parent=23 // pred_region
          %s191 = sand.u32 %s96, 1
          %s192 = scalar_lea.sflag [#allocation4], %s191
          %s193 = sand.u32 %s96, 1
          %s194 = smul.addr %s193, 256
          %s195 = scalar_lea.vmem [#allocation9], %s194
          %s196 = smul.u32 16, %s18
          %s198 = ssub.s32 4096, 4096
          %199 = vsyncadd %s192, %s198
          %s200 = smul.addr %s196, 2
          %s201 = smul.addr %s200, 128
          %s202 = scalar_lea.hbm %s3, %s201
          %s203 = sshll.u32 %s195, 4
          %s204 = int_to_ptr.vmem [resolvable:$true] %s203
          %209 = dma.hbm_to_vmem [thread:$0]  %s202, 4096, %s204, %s192, 256, 256, 16
        $region32: #{tpu_custom_call.1} parent=23 // pred_fallthru
          _
      $region24: #{tpu_custom_call.1} parent=5 // pred_fallthru
        _
      %p210 = scmp.le.s32.totalorder 1, %s18
      %p211 = scmp.lt.s32.totalorder %s18, 3
      %p212 = pnand %p210, %p211
      %p213 = pneg %p212
      // Predicated region
      $region33: #{tpu_custom_call.1} parent=5 // pred_check
        _
      $region34: #{tpu_custom_call.1} parent=5 // pred_check_branch
        %215 = sbr.rel (%p212) target = $region36
      $region35: #{tpu_custom_call.1} parent=5 // pred_region
        %s216 = ssub.s32 %s18, 1
        // Predicated region
        $region37: #{tpu_custom_call.1} parent=35 // pred_check
          %p217 = pneg %p39
        $region38: #{tpu_custom_call.1} parent=35 // pred_check_branch
          %219 = sbr.rel (%p217) target = $region40
        $region39: #{tpu_custom_call.1} parent=35 // pred_region
          %220 = dma.done [#allocation6], 16
        $region40: #{tpu_custom_call.1} parent=35 // pred_fallthru
          _
        // Predicated region
        $region41: #{tpu_custom_call.1} parent=35 // pred_check
          %p221 = pneg %p60
        $region42: #{tpu_custom_call.1} parent=35 // pred_check_branch
          %223 = sbr.rel (%p221) target = $region44
        $region43: #{tpu_custom_call.1} parent=35 // pred_region
          %224 = dma.done [#allocation8], 16
        $region44: #{tpu_custom_call.1} parent=35 // pred_fallthru
          _
        %s225 = sand.u32 %s99, 1
        %s226 = scalar_lea.sflag [#allocation4], %s225
        %s227 = sand.u32 %s99, 1
        %s228 = smul.addr %s227, 256
        %s229 = scalar_lea.vmem [#allocation9], %s228
        // Predicated region
        $region45: #{tpu_custom_call.1} parent=35 // pred_check
          %p230 = pneg %p112
        $region46: #{tpu_custom_call.1} parent=35 // pred_check_branch
          %232 = sbr.rel (%p230) target = $region48
        $region47: #{tpu_custom_call.1} parent=35 // pred_region
          %233 = dma.done %s226, 4096
        $region48: #{tpu_custom_call.1} parent=35 // pred_fallthru
          _
        %234 = sfence
        %p235 = pneg %p39
        %p236 = pneg %p36
        %p237 = pneg %p60
        %p238 = pneg %p57
        %s239 = smul.u32 16, %s23
        %p240 = scmp.lt.s32.totalorder %s239, 31
        %s241 = scalar_select %p240, %s239, 31
        %s242 = smul.addr %s241, 8
        %s243 = scalar_lea.vmem %s2, %s242
        %p244 = pneg %p86
        %p245 = pneg %p83
        %s246 = sand.u32 %s99, 1
        %s247 = scalar_lea.sflag [#allocation4], %s246
        %s248 = sand.u32 %s99, 1
        %s249 = smul.addr %s248, 256
        %s250 = scalar_lea.vmem [#allocation9], %s249
        %p251 = pneg %p112
        %p252 = pneg %p109
        %p253 = pneg %p138
        %p254 = pneg %p135
        %s255 = sand.u32 %s125, 1
        %s256 = scalar_lea.sflag [#allocation5], %s255
        %s257 = sand.u32 %s125, 1
        %s258 = smul.addr %s257, 256
        %s259 = scalar_lea.vmem [#allocation10], %s258
        %s260 = smul.u32 16, %s23
        %p261 = scmp.lt.s32.totalorder %s260, 31
        %s262 = scalar_select %p261, %s260, 31
        %s263 = smul.addr %s262, 8
        %s264 = scalar_lea.vmem %s2, %s263
        %s265 = smul.u32 16, %s23
        %s266 = smul.u32 16, %s23
        %s267 = smul.u32 16, %s23
        %v268 = vld [vmem:[%s229] sm:$0xff]
        %v269 = vld [vmem:[%s229 + $0x8] sm:$0xff]
        %v270 = vld [vmem:[%s229 + $0x10] sm:$0xff]
        %v271 = vld [vmem:[%s229 + $0x18] sm:$0xff]
        %v272 = vld [vmem:[%s229 + $0x20] sm:$0xff]
        %v273 = vld [vmem:[%s229 + $0x28] sm:$0xff]
        %v274 = vld [vmem:[%s229 + $0x30] sm:$0xff]
        %v275 = vld [vmem:[%s229 + $0x38] sm:$0xff]
        %v276 = vld [vmem:[%s229 + $0x40] sm:$0xff]
        %v277 = vld [vmem:[%s229 + $0x48] sm:$0xff]
        %v278 = vld [vmem:[%s229 + $0x50] sm:$0xff]
        %v279 = vld [vmem:[%s229 + $0x58] sm:$0xff]
        %v280 = vld [vmem:[%s229 + $0x60] sm:$0xff]
        %v281 = vld [vmem:[%s229 + $0x68] sm:$0xff]
        %v282 = vld [vmem:[%s229 + $0x70] sm:$0xff]
        %v283 = vld [vmem:[%s229 + $0x78] sm:$0xff]
        %v284 = vld [vmem:[%s229 + $0x80] sm:$0xff]
        %v285 = vld [vmem:[%s229 + $0x88] sm:$0xff]
        %v286 = vld [vmem:[%s229 + $0x90] sm:$0xff]
        %v287 = vld [vmem:[%s229 + $0x98] sm:$0xff]
        %v288 = vld [vmem:[%s229 + $0xa0] sm:$0xff]
        %v289 = vld [vmem:[%s229 + $0xa8] sm:$0xff]
        %v290 = vld [vmem:[%s229 + $0xb0] sm:$0xff]
        %v291 = vld [vmem:[%s229 + $0xb8] sm:$0xff]
        %v292 = vld [vmem:[%s229 + $0xc0] sm:$0xff]
        %v293 = vld [vmem:[%s229 + $0xc8] sm:$0xff]
        %v294 = vld [vmem:[%s229 + $0xd0] sm:$0xff]
        %v295 = vld [vmem:[%s229 + $0xd8] sm:$0xff]
        %v296 = vld [vmem:[%s229 + $0xe0] sm:$0xff]
        %v297 = vld [vmem:[%s229 + $0xe8] sm:$0xff]
        %v298 = vld [vmem:[%s229 + $0xf0] sm:$0xff]
        %v299 = vld [vmem:[%s229 + $0xf8] sm:$0xff]
        %v300 = vadd.f32 %v268, %v269
        %301 = vadd.xlane.f32.xlu0 %v300
        %v302 = vpop.xlane.xlu0 %301
        %v303 = vadd.f32 %v270, %v271
        %304 = vadd.xlane.f32.xlu0 %v303
        %v305 = vpop.xlane.xlu0 %304
        %v306 = vadd.f32 %v272, %v273
        %307 = vadd.xlane.f32.xlu0 %v306
        %v308 = vpop.xlane.xlu0 %307
        %v309 = vadd.f32 %v274, %v275
        %310 = vadd.xlane.f32.xlu0 %v309
        %v311 = vpop.xlane.xlu0 %310
        %v312 = vadd.f32 %v276, %v277
        %313 = vadd.xlane.f32.xlu0 %v312
        %v314 = vpop.xlane.xlu0 %313
        %v315 = vadd.f32 %v278, %v279
        %316 = vadd.xlane.f32.xlu0 %v315
        %v317 = vpop.xlane.xlu0 %316
        %v318 = vadd.f32 %v280, %v281
        %319 = vadd.xlane.f32.xlu0 %v318
        %v320 = vpop.xlane.xlu0 %319
        %v321 = vadd.f32 %v282, %v283
        %322 = vadd.xlane.f32.xlu0 %v321
        %v323 = vpop.xlane.xlu0 %322
        %v324 = vadd.f32 %v284, %v285
        %325 = vadd.xlane.f32.xlu0 %v324
        %v326 = vpop.xlane.xlu0 %325
        %v327 = vadd.f32 %v286, %v287
        %328 = vadd.xlane.f32.xlu0 %v327
        %v329 = vpop.xlane.xlu0 %328
        %v330 = vadd.f32 %v288, %v289
        %331 = vadd.xlane.f32.xlu0 %v330
        %v332 = vpop.xlane.xlu0 %331
        %v333 = vadd.f32 %v290, %v291
        %334 = vadd.xlane.f32.xlu0 %v333
        %v335 = vpop.xlane.xlu0 %334
        %v336 = vadd.f32 %v292, %v293
        %337 = vadd.xlane.f32.xlu0 %v336
        %v338 = vpop.xlane.xlu0 %337
        %v339 = vadd.f32 %v294, %v295
        %340 = vadd.xlane.f32.xlu0 %v339
        %v341 = vpop.xlane.xlu0 %340
        %v342 = vadd.f32 %v296, %v297
        %343 = vadd.xlane.f32.xlu0 %v342
        %v344 = vpop.xlane.xlu0 %343
        %v345 = vadd.f32 %v298, %v299
        %346 = vadd.xlane.f32.xlu0 %v345
        %v347 = vpop.xlane.xlu0 %346
        %v348 = vmul.f32 %v268, %v268
        %v349 = vmul.f32 %v269, %v269
        %v350 = vmul.f32 %v270, %v270
        %v351 = vmul.f32 %v271, %v271
        %v352 = vmul.f32 %v272, %v272
        %v353 = vmul.f32 %v273, %v273
        %v354 = vmul.f32 %v274, %v274
        %v355 = vmul.f32 %v275, %v275
        %v356 = vmul.f32 %v276, %v276
        %v357 = vmul.f32 %v277, %v277
        %v358 = vmul.f32 %v278, %v278
        %v359 = vmul.f32 %v279, %v279
        %v360 = vmul.f32 %v280, %v280
        %v361 = vmul.f32 %v281, %v281
        %v362 = vmul.f32 %v282, %v282
        %v363 = vmul.f32 %v283, %v283
        %v364 = vmul.f32 %v284, %v284
        %v365 = vmul.f32 %v285, %v285
        %v366 = vmul.f32 %v286, %v286
        %v367 = vmul.f32 %v287, %v287
        %v368 = vmul.f32 %v288, %v288
        %v369 = vmul.f32 %v289, %v289
        %v370 = vmul.f32 %v290, %v290
        %v371 = vmul.f32 %v291, %v291
        %v372 = vmul.f32 %v292, %v292
        %v373 = vmul.f32 %v293, %v293
        %v374 = vmul.f32 %v294, %v294
        %v375 = vmul.f32 %v295, %v295
        %v376 = vmul.f32 %v296, %v296
        %v377 = vmul.f32 %v297, %v297
        %v378 = vmul.f32 %v298, %v298
        %v379 = vmul.f32 %v299, %v299
        %v380 = vadd.f32 %v348, %v349
        %381 = vadd.xlane.f32.xlu0 %v380
        %v382 = vpop.xlane.xlu0 %381
        %v383 = vadd.f32 %v350, %v351
        %384 = vadd.xlane.f32.xlu0 %v383
        %v385 = vpop.xlane.xlu0 %384
        %v386 = vadd.f32 %v352, %v353
        %387 = vadd.xlane.f32.xlu0 %v386
        %v388 = vpop.xlane.xlu0 %387
        %v389 = vadd.f32 %v354, %v355
        %390 = vadd.xlane.f32.xlu0 %v389
        %v391 = vpop.xlane.xlu0 %390
        %v392 = vadd.f32 %v356, %v357
        %393 = vadd.xlane.f32.xlu0 %v392
        %v394 = vpop.xlane.xlu0 %393
        %v395 = vadd.f32 %v358, %v359
        %396 = vadd.xlane.f32.xlu0 %v395
        %v397 = vpop.xlane.xlu0 %396
        %v398 = vadd.f32 %v360, %v361
        %399 = vadd.xlane.f32.xlu0 %v398
        %v400 = vpop.xlane.xlu0 %399
        %v401 = vadd.f32 %v362, %v363
        %402 = vadd.xlane.f32.xlu0 %v401
        %v403 = vpop.xlane.xlu0 %402
        %v404 = vadd.f32 %v364, %v365
        %405 = vadd.xlane.f32.xlu0 %v404
        %v406 = vpop.xlane.xlu0 %405
        %v407 = vadd.f32 %v366, %v367
        %408 = vadd.xlane.f32.xlu0 %v407
        %v409 = vpop.xlane.xlu0 %408
        %v410 = vadd.f32 %v368, %v369
        %411 = vadd.xlane.f32.xlu0 %v410
        %v412 = vpop.xlane.xlu0 %411
        %v413 = vadd.f32 %v370, %v371
        %414 = vadd.xlane.f32.xlu0 %v413
        %v415 = vpop.xlane.xlu0 %414
        %v416 = vadd.f32 %v372, %v373
        %417 = vadd.xlane.f32.xlu0 %v416
        %v418 = vpop.xlane.xlu0 %417
        %v419 = vadd.f32 %v374, %v375
        %420 = vadd.xlane.f32.xlu0 %v419
        %v421 = vpop.xlane.xlu0 %420
        %v422 = vadd.f32 %v376, %v377
        %423 = vadd.xlane.f32.xlu0 %v422
        %v424 = vpop.xlane.xlu0 %423
        %v425 = vadd.f32 %v378, %v379
        %426 = vadd.xlane.f32.xlu0 %v425
        %v427 = vpop.xlane.xlu0 %426
        %v428 = vmul.f32 %v302, 0.00390625
        %v429 = vmul.f32 %v305, 0.00390625
        %v430 = vmul.f32 %v308, 0.00390625
        %v431 = vmul.f32 %v311, 0.00390625
        %v432 = vmul.f32 %v314, 0.00390625
        %v433 = vmul.f32 %v317, 0.00390625
        %v434 = vmul.f32 %v320, 0.00390625
        %v435 = vmul.f32 %v323, 0.00390625
        %v436 = vmul.f32 %v326, 0.00390625
        %v437 = vmul.f32 %v329, 0.00390625
        %v438 = vmul.f32 %v332, 0.00390625
        %v439 = vmul.f32 %v335, 0.00390625
        %v440 = vmul.f32 %v338, 0.00390625
        %v441 = vmul.f32 %v341, 0.00390625
        %v442 = vmul.f32 %v344, 0.00390625
        %v443 = vmul.f32 %v347, 0.00390625
        %v444 = vmul.f32 %v428, 256.0
        %v445 = vmul.f32 %v429, 256.0
        %v446 = vmul.f32 %v430, 256.0
        %v447 = vmul.f32 %v431, 256.0
        %v448 = vmul.f32 %v432, 256.0
        %v449 = vmul.f32 %v433, 256.0
        %v450 = vmul.f32 %v434, 256.0
        %v451 = vmul.f32 %v435, 256.0
        %v452 = vmul.f32 %v436, 256.0
        %v453 = vmul.f32 %v437, 256.0
        %v454 = vmul.f32 %v438, 256.0
        %v455 = vmul.f32 %v439, 256.0
        %v456 = vmul.f32 %v440, 256.0
        %v457 = vmul.f32 %v441, 256.0
        %v458 = vmul.f32 %v442, 256.0
        %v459 = vmul.f32 %v443, 256.0
        %v460 = vmul.f32 %v444, %v428
        %v461 = vmul.f32 %v445, %v429
        %v462 = vmul.f32 %v446, %v430
        %v463 = vmul.f32 %v447, %v431
        %v464 = vmul.f32 %v448, %v432
        %v465 = vmul.f32 %v449, %v433
        %v466 = vmul.f32 %v450, %v434
        %v467 = vmul.f32 %v451, %v435
        %v468 = vmul.f32 %v452, %v436
        %v469 = vmul.f32 %v453, %v437
        %v470 = vmul.f32 %v454, %v438
        %v471 = vmul.f32 %v455, %v439
        %v472 = vmul.f32 %v456, %v440
        %v473 = vmul.f32 %v457, %v441
        %v474 = vmul.f32 %v458, %v442
        %v475 = vmul.f32 %v459, %v443
        %v476 = vsub.f32 %v382, %v460
        %v477 = vsub.f32 %v385, %v461
        %v478 = vsub.f32 %v388, %v462
        %v479 = vsub.f32 %v391, %v463
        %v480 = vsub.f32 %v394, %v464
        %v481 = vsub.f32 %v397, %v465
        %v482 = vsub.f32 %v400, %v466
        %v483 = vsub.f32 %v403, %v467
        %v484 = vsub.f32 %v406, %v468
        %v485 = vsub.f32 %v409, %v469
        %v486 = vsub.f32 %v412, %v470
        %v487 = vsub.f32 %v415, %v471
        %v488 = vsub.f32 %v418, %v472
        %v489 = vsub.f32 %v421, %v473
        %v490 = vsub.f32 %v424, %v474
        %v491 = vsub.f32 %v427, %v475
        %v492 = vrcp.pop 255.0
        %v493 = vmul.f32 %v476, %v492
        %v494 = vmul.f32 %v477, %v492
        %v495 = vmul.f32 %v478, %v492
        %v496 = vmul.f32 %v479, %v492
        %v497 = vmul.f32 %v480, %v492
        %v498 = vmul.f32 %v481, %v492
        %v499 = vmul.f32 %v482, %v492
        %v500 = vmul.f32 %v483, %v492
        %v501 = vmul.f32 %v484, %v492
        %v502 = vmul.f32 %v485, %v492
        %v503 = vmul.f32 %v486, %v492
        %v504 = vmul.f32 %v487, %v492
        %v505 = vmul.f32 %v488, %v492
        %v506 = vmul.f32 %v489, %v492
        %v507 = vmul.f32 %v490, %v492
        %v508 = vmul.f32 %v491, %v492
        %v509 = vmax.f32 %v493, 0.0
        %v510 = vmax.f32 %v494, 0.0
        %v511 = vmax.f32 %v495, 0.0
        %v512 = vmax.f32 %v496, 0.0
        %v513 = vmax.f32 %v497, 0.0
        %v514 = vmax.f32 %v498, 0.0
        %v515 = vmax.f32 %v499, 0.0
        %v516 = vmax.f32 %v500, 0.0
        %v517 = vmax.f32 %v501, 0.0
        %v518 = vmax.f32 %v502, 0.0
        %v519 = vmax.f32 %v503, 0.0
        %v520 = vmax.f32 %v504, 0.0
        %v521 = vmax.f32 %v505, 0.0
        %v522 = vmax.f32 %v506, 0.0
        %v523 = vmax.f32 %v507, 0.0
        %v524 = vmax.f32 %v508, 0.0
        %v525 = vrsqrt.pop %v509
        %v526 = vmul.f32 %v509, %v525
        %vm527 = vcmp.eq.f32.partialorder %v509, inf
        %v528 = vsel %vm527, %v509, %v526
        %vm529 = vcmp.eq.f32.partialorder %v509, 0.0
        %v530 = vand.u32 %v509, 2147483648
        %v531 = vsel %vm529, %v530, %v528
        %v532 = vrsqrt.pop %v510
        %v533 = vmul.f32 %v510, %v532
        %vm534 = vcmp.eq.f32.partialorder %v510, inf
        %v535 = vsel %vm534, %v510, %v533
        %vm536 = vcmp.eq.f32.partialorder %v510, 0.0
        %v537 = vand.u32 %v510, 2147483648
        %v538 = vsel %vm536, %v537, %v535
        %v539 = vrsqrt.pop %v511
        %v540 = vmul.f32 %v511, %v539
        %vm541 = vcmp.eq.f32.partialorder %v511, inf
        %v542 = vsel %vm541, %v511, %v540
        %vm543 = vcmp.eq.f32.partialorder %v511, 0.0
        %v544 = vand.u32 %v511, 2147483648
        %v545 = vsel %vm543, %v544, %v542
        %v546 = vrsqrt.pop %v512
        %v547 = vmul.f32 %v512, %v546
        %vm548 = vcmp.eq.f32.partialorder %v512, inf
        %v549 = vsel %vm548, %v512, %v547
        %vm550 = vcmp.eq.f32.partialorder %v512, 0.0
        %v551 = vand.u32 %v512, 2147483648
        %v552 = vsel %vm550, %v551, %v549
        %v553 = vrsqrt.pop %v513
        %v554 = vmul.f32 %v513, %v553
        %vm555 = vcmp.eq.f32.partialorder %v513, inf
        %v556 = vsel %vm555, %v513, %v554
        %vm557 = vcmp.eq.f32.partialorder %v513, 0.0
        %v558 = vand.u32 %v513, 2147483648
        %v559 = vsel %vm557, %v558, %v556
        %v560 = vrsqrt.pop %v514
        %v561 = vmul.f32 %v514, %v560
        %vm562 = vcmp.eq.f32.partialorder %v514, inf
        %v563 = vsel %vm562, %v514, %v561
        %vm564 = vcmp.eq.f32.partialorder %v514, 0.0
        %v565 = vand.u32 %v514, 2147483648
        %v566 = vsel %vm564, %v565, %v563
        %v567 = vrsqrt.pop %v515
        %v568 = vmul.f32 %v515, %v567
        %vm569 = vcmp.eq.f32.partialorder %v515, inf
        %v570 = vsel %vm569, %v515, %v568
        %vm571 = vcmp.eq.f32.partialorder %v515, 0.0
        %v572 = vand.u32 %v515, 2147483648
        %v573 = vsel %vm571, %v572, %v570
        %v574 = vrsqrt.pop %v516
        %v575 = vmul.f32 %v516, %v574
        %vm576 = vcmp.eq.f32.partialorder %v516, inf
        %v577 = vsel %vm576, %v516, %v575
        %vm578 = vcmp.eq.f32.partialorder %v516, 0.0
        %v579 = vand.u32 %v516, 2147483648
        %v580 = vsel %vm578, %v579, %v577
        %v581 = vrsqrt.pop %v517
        %v582 = vmul.f32 %v517, %v581
        %vm583 = vcmp.eq.f32.partialorder %v517, inf
        %v584 = vsel %vm583, %v517, %v582
        %vm585 = vcmp.eq.f32.partialorder %v517, 0.0
        %v586 = vand.u32 %v517, 2147483648
        %v587 = vsel %vm585, %v586, %v584
        %v588 = vrsqrt.pop %v518
        %v589 = vmul.f32 %v518, %v588
        %vm590 = vcmp.eq.f32.partialorder %v518, inf
        %v591 = vsel %vm590, %v518, %v589
        %vm592 = vcmp.eq.f32.partialorder %v518, 0.0
        %v593 = vand.u32 %v518, 2147483648
        %v594 = vsel %vm592, %v593, %v591
        %v595 = vrsqrt.pop %v519
        %v596 = vmul.f32 %v519, %v595
        %vm597 = vcmp.eq.f32.partialorder %v519, inf
        %v598 = vsel %vm597, %v519, %v596
        %vm599 = vcmp.eq.f32.partialorder %v519, 0.0
        %v600 = vand.u32 %v519, 2147483648
        %v601 = vsel %vm599, %v600, %v598
        %v602 = vrsqrt.pop %v520
        %v603 = vmul.f32 %v520, %v602
        %vm604 = vcmp.eq.f32.partialorder %v520, inf
        %v605 = vsel %vm604, %v520, %v603
        %vm606 = vcmp.eq.f32.partialorder %v520, 0.0
        %v607 = vand.u32 %v520, 2147483648
        %v608 = vsel %vm606, %v607, %v605
        %v609 = vrsqrt.pop %v521
        %v610 = vmul.f32 %v521, %v609
        %vm611 = vcmp.eq.f32.partialorder %v521, inf
        %v612 = vsel %vm611, %v521, %v610
        %vm613 = vcmp.eq.f32.partialorder %v521, 0.0
        %v614 = vand.u32 %v521, 2147483648
        %v615 = vsel %vm613, %v614, %v612
        %v616 = vrsqrt.pop %v522
        %v617 = vmul.f32 %v522, %v616
        %vm618 = vcmp.eq.f32.partialorder %v522, inf
        %v619 = vsel %vm618, %v522, %v617
        %vm620 = vcmp.eq.f32.partialorder %v522, 0.0
        %v621 = vand.u32 %v522, 2147483648
        %v622 = vsel %vm620, %v621, %v619
        %v623 = vrsqrt.pop %v523
        %v624 = vmul.f32 %v523, %v623
        %vm625 = vcmp.eq.f32.partialorder %v523, inf
        %v626 = vsel %vm625, %v523, %v624
        %vm627 = vcmp.eq.f32.partialorder %v523, 0.0
        %v628 = vand.u32 %v523, 2147483648
        %v629 = vsel %vm627, %v628, %v626
        %v630 = vrsqrt.pop %v524
        %v631 = vmul.f32 %v524, %v630
        %vm632 = vcmp.eq.f32.partialorder %v524, inf
        %v633 = vsel %vm632, %v524, %v631
        %vm634 = vcmp.eq.f32.partialorder %v524, 0.0
        %v635 = vand.u32 %v524, 2147483648
        %v636 = vsel %vm634, %v635, %v633
        %s637 = sld [smem:[#allocation3]]
        %v638 = vstv %s637
        %v639 = vmul.f32 %v638, %v428
        %v640 = vmul.f32 %v638, %v429
        %v641 = vmul.f32 %v638, %v430
        %v642 = vmul.f32 %v638, %v431
        %v643 = vmul.f32 %v638, %v432
        %v644 = vmul.f32 %v638, %v433
        %v645 = vmul.f32 %v638, %v434
        %v646 = vmul.f32 %v638, %v435
        %v647 = vmul.f32 %v638, %v436
        %v648 = vmul.f32 %v638, %v437
        %v649 = vmul.f32 %v638, %v438
        %v650 = vmul.f32 %v638, %v439
        %v651 = vmul.f32 %v638, %v440
        %v652 = vmul.f32 %v638, %v441
        %v653 = vmul.f32 %v638, %v442
        %v654 = vmul.f32 %v638, %v443
        %s655 = sld [smem:[#allocation3 + $0x1]]
        %v656 = vstv %s655
        %v657 = vmul.f32 %v656, %v531
        %v658 = vmul.f32 %v656, %v538
        %v659 = vmul.f32 %v656, %v545
        %v660 = vmul.f32 %v656, %v552
        %v661 = vmul.f32 %v656, %v559
        %v662 = vmul.f32 %v656, %v566
        %v663 = vmul.f32 %v656, %v573
        %v664 = vmul.f32 %v656, %v580
        %v665 = vmul.f32 %v656, %v587
        %v666 = vmul.f32 %v656, %v594
        %v667 = vmul.f32 %v656, %v601
        %v668 = vmul.f32 %v656, %v608
        %v669 = vmul.f32 %v656, %v615
        %v670 = vmul.f32 %v656, %v622
        %v671 = vmul.f32 %v656, %v629
        %v672 = vmul.f32 %v656, %v636
        %v673 = vadd.f32 %v639, %v657
        %v674 = vadd.f32 %v640, %v658
        %v675 = vadd.f32 %v641, %v659
        %v676 = vadd.f32 %v642, %v660
        %v677 = vadd.f32 %v643, %v661
        %v678 = vadd.f32 %v644, %v662
        %v679 = vadd.f32 %v645, %v663
        %v680 = vadd.f32 %v646, %v664
        %v681 = vadd.f32 %v647, %v665
        %v682 = vadd.f32 %v648, %v666
        %v683 = vadd.f32 %v649, %v667
        %v684 = vadd.f32 %v650, %v668
        %v685 = vadd.f32 %v651, %v669
        %v686 = vadd.f32 %v652, %v670
        %v687 = vadd.f32 %v653, %v671
        %v688 = vadd.f32 %v654, %v672
        %vm689 = vcmask 7168
        %690 = vst.msk [vmem:[#allocation2] sm:$0xff] %vm689, 0.0
        %691 = vst.msk [vmem:[#allocation2 + $0x8] sm:$0xff] %vm689, 0.0
        %692 = vst.msk [vmem:[#allocation2 + $0x10] sm:$0xff] %vm689, 0.0
        %693 = vst.msk [vmem:[#allocation2 + $0x18] sm:$0xff] %vm689, 0.0
        %694 = vst.msk [vmem:[#allocation2 + $0x20] sm:$0xff] %vm689, 0.0
        %695 = vst.msk [vmem:[#allocation2 + $0x28] sm:$0xff] %vm689, 0.0
        %696 = vst.msk [vmem:[#allocation2 + $0x30] sm:$0xff] %vm689, 0.0
        %697 = vst.msk [vmem:[#allocation2 + $0x38] sm:$0xff] %vm689, 0.0
        %698 = vst.msk [vmem:[#allocation2 + $0x40] sm:$0xff] %vm689, 0.0
        %699 = vst.msk [vmem:[#allocation2 + $0x48] sm:$0xff] %vm689, 0.0
        %700 = vst.msk [vmem:[#allocation2 + $0x50] sm:$0xff] %vm689, 0.0
        %701 = vst.msk [vmem:[#allocation2 + $0x58] sm:$0xff] %vm689, 0.0
        %702 = vst.msk [vmem:[#allocation2 + $0x60] sm:$0xff] %vm689, 0.0
        %703 = vst.msk [vmem:[#allocation2 + $0x68] sm:$0xff] %vm689, 0.0
        %704 = vst.msk [vmem:[#allocation2 + $0x70] sm:$0xff] %vm689, 0.0
        %705 = vst.msk [vmem:[#allocation2 + $0x78] sm:$0xff] %vm689, 0.0
        %706 = vst.msk [vmem:[#allocation2 + $0x80] sm:$0xff] %vm689, 0.0
        %707 = vst.msk [vmem:[#allocation2 + $0x88] sm:$0xff] %vm689, 0.0
        %708 = vst.msk [vmem:[#allocation2 + $0x8] sm:$0xff] %vm689, %v673
        %709 = vst.msk [vmem:[#allocation2 + $0x10] sm:$0xff] %vm689, %v674
        %710 = vst.msk [vmem:[#allocation2 + $0x18] sm:$0xff] %vm689, %v675
        %711 = vst.msk [vmem:[#allocation2 + $0x20] sm:$0xff] %vm689, %v676
        %712 = vst.msk [vmem:[#allocation2 + $0x28] sm:$0xff] %vm689, %v677
        %713 = vst.msk [vmem:[#allocation2 + $0x30] sm:$0xff] %vm689, %v678
        %714 = vst.msk [vmem:[#allocation2 + $0x38] sm:$0xff] %vm689, %v679
        %715 = vst.msk [vmem:[#allocation2 + $0x40] sm:$0xff] %vm689, %v680
        %716 = vst.msk [vmem:[#allocation2 + $0x48] sm:$0xff] %vm689, %v681
        %717 = vst.msk [vmem:[#allocation2 + $0x50] sm:$0xff] %vm689, %v682
        %718 = vst.msk [vmem:[#allocation2 + $0x58] sm:$0xff] %vm689, %v683
        %719 = vst.msk [vmem:[#allocation2 + $0x60] sm:$0xff] %vm689, %v684
        %720 = vst.msk [vmem:[#allocation2 + $0x68] sm:$0xff] %vm689, %v685
        %721 = vst.msk [vmem:[#allocation2 + $0x70] sm:$0xff] %vm689, %v686
        %722 = vst.msk [vmem:[#allocation2 + $0x78] sm:$0xff] %vm689, %v687
        %723 = vst.msk [vmem:[#allocation2 + $0x80] sm:$0xff] %vm689, %v688
        %v724 = vld [vmem:[%s264] sm:$0xff]
        %v725 = vld [vmem:[%s264 + $0x8] sm:$0xff]
        %v726 = vld [vmem:[%s264 + $0x10] sm:$0xff]
        %v727 = vld [vmem:[%s264 + $0x18] sm:$0xff]
        %v728 = vld [vmem:[%s264 + $0x20] sm:$0xff]
        %v729 = vld [vmem:[%s264 + $0x28] sm:$0xff]
        %v730 = vld [vmem:[%s264 + $0x30] sm:$0xff]
        %v731 = vld [vmem:[%s264 + $0x38] sm:$0xff]
        %v732 = vld [vmem:[%s264 + $0x40] sm:$0xff]
        %v733 = vld [vmem:[%s264 + $0x48] sm:$0xff]
        %v734 = vld [vmem:[%s264 + $0x50] sm:$0xff]
        %v735 = vld [vmem:[%s264 + $0x58] sm:$0xff]
        %v736 = vld [vmem:[%s264 + $0x60] sm:$0xff]
        %v737 = vld [vmem:[%s264 + $0x68] sm:$0xff]
        %v738 = vld [vmem:[%s264 + $0x70] sm:$0xff]
        %v739 = vld [vmem:[%s264 + $0x78] sm:$0xff]
        %v740 = vld [vmem:[#allocation2 + $0x7] sm:$0xff]
        %v741 = vld [vmem:[#allocation2 + $0xf] sm:$0xff]
        %v742 = vld [vmem:[#allocation2 + $0x17] sm:$0xff]
        %v743 = vld [vmem:[#allocation2 + $0x1f] sm:$0xff]
        %v744 = vld [vmem:[#allocation2 + $0x27] sm:$0xff]
        %v745 = vld [vmem:[#allocation2 + $0x2f] sm:$0xff]
        %v746 = vld [vmem:[#allocation2 + $0x37] sm:$0xff]
        %v747 = vld [vmem:[#allocation2 + $0x3f] sm:$0xff]
        %v748 = vld [vmem:[#allocation2 + $0x47] sm:$0xff]
        %v749 = vld [vmem:[#allocation2 + $0x4f] sm:$0xff]
        %v750 = vld [vmem:[#allocation2 + $0x57] sm:$0xff]
        %v751 = vld [vmem:[#allocation2 + $0x5f] sm:$0xff]
        %v752 = vld [vmem:[#allocation2 + $0x67] sm:$0xff]
        %v753 = vld [vmem:[#allocation2 + $0x6f] sm:$0xff]
        %v754 = vld [vmem:[#allocation2 + $0x77] sm:$0xff]
        %v755 = vld [vmem:[#allocation2 + $0x7f] sm:$0xff]
        %v756 = vadd.s32 %v724, 4294967295
        %v757 = vadd.s32 %v725, 4294967295
        %v758 = vadd.s32 %v726, 4294967295
        %v759 = vadd.s32 %v727, 4294967295
        %v760 = vadd.s32 %v728, 4294967295
        %v761 = vadd.s32 %v729, 4294967295
        %v762 = vadd.s32 %v730, 4294967295
        %v763 = vadd.s32 %v731, 4294967295
        %v764 = vadd.s32 %v732, 4294967295
        %v765 = vadd.s32 %v733, 4294967295
        %v766 = vadd.s32 %v734, 4294967295
        %v767 = vadd.s32 %v735, 4294967295
        %v768 = vadd.s32 %v736, 4294967295
        %v769 = vadd.s32 %v737, 4294967295
        %v770 = vadd.s32 %v738, 4294967295
        %v771 = vadd.s32 %v739, 4294967295
        %vm772 = vcmp.ge.s32.totalorder %v756, 0
        %vm773 = vcmp.ge.s32.totalorder %v757, 0
        %vm774 = vcmp.ge.s32.totalorder %v758, 0
        %vm775 = vcmp.ge.s32.totalorder %v759, 0
        %vm776 = vcmp.ge.s32.totalorder %v760, 0
        %vm777 = vcmp.ge.s32.totalorder %v761, 0
        %vm778 = vcmp.ge.s32.totalorder %v762, 0
        %vm779 = vcmp.ge.s32.totalorder %v763, 0
        %vm780 = vcmp.ge.s32.totalorder %v764, 0
        %vm781 = vcmp.ge.s32.totalorder %v765, 0
        %vm782 = vcmp.ge.s32.totalorder %v766, 0
        %vm783 = vcmp.ge.s32.totalorder %v767, 0
        %vm784 = vcmp.ge.s32.totalorder %v768, 0
        %vm785 = vcmp.ge.s32.totalorder %v769, 0
        %vm786 = vcmp.ge.s32.totalorder %v770, 0
        %vm787 = vcmp.ge.s32.totalorder %v771, 0
        %vm788 = vcmp.lt.s32.totalorder %v756, 128
        %vm789 = vcmp.lt.s32.totalorder %v757, 128
        %vm790 = vcmp.lt.s32.totalorder %v758, 128
        %vm791 = vcmp.lt.s32.totalorder %v759, 128
        %vm792 = vcmp.lt.s32.totalorder %v760, 128
        %vm793 = vcmp.lt.s32.totalorder %v761, 128
        %vm794 = vcmp.lt.s32.totalorder %v762, 128
        %vm795 = vcmp.lt.s32.totalorder %v763, 128
        %vm796 = vcmp.lt.s32.totalorder %v764, 128
        %vm797 = vcmp.lt.s32.totalorder %v765, 128
        %vm798 = vcmp.lt.s32.totalorder %v766, 128
        %vm799 = vcmp.lt.s32.totalorder %v767, 128
        %vm800 = vcmp.lt.s32.totalorder %v768, 128
        %vm801 = vcmp.lt.s32.totalorder %v769, 128
        %vm802 = vcmp.lt.s32.totalorder %v770, 128
        %vm803 = vcmp.lt.s32.totalorder %v771, 128
        %vm804 = vmand %vm772, %vm788
        %vm805 = vmand %vm773, %vm789
        %vm806 = vmand %vm774, %vm790
        %vm807 = vmand %vm775, %vm791
        %vm808 = vmand %vm776, %vm792
        %vm809 = vmand %vm777, %vm793
        %vm810 = vmand %vm778, %vm794
        %vm811 = vmand %vm779, %vm795
        %vm812 = vmand %vm780, %vm796
        %vm813 = vmand %vm781, %vm797
        %vm814 = vmand %vm782, %vm798
        %vm815 = vmand %vm783, %vm799
        %vm816 = vmand %vm784, %vm800
        %vm817 = vmand %vm785, %vm801
        %vm818 = vmand %vm786, %vm802
        %vm819 = vmand %vm787, %vm803
        %v820 = vsel %vm804, %v740, 0.0
        %v821 = vsel %vm805, %v741, 0.0
        %v822 = vsel %vm806, %v742, 0.0
        %v823 = vsel %vm807, %v743, 0.0
        %v824 = vsel %vm808, %v744, 0.0
        %v825 = vsel %vm809, %v745, 0.0
        %v826 = vsel %vm810, %v746, 0.0
        %v827 = vsel %vm811, %v747, 0.0
        %v828 = vsel %vm812, %v748, 0.0
        %v829 = vsel %vm813, %v749, 0.0
        %v830 = vsel %vm814, %v750, 0.0
        %v831 = vsel %vm815, %v751, 0.0
        %v832 = vsel %vm816, %v752, 0.0
        %v833 = vsel %vm817, %v753, 0.0
        %v834 = vsel %vm818, %v754, 0.0
        %v835 = vsel %vm819, %v755, 0.0
        %s836 = sld [smem:[#allocation7]]
        %v837 = vstv %s836
        %v838 = vmul.f32 %v837, %v820
        %v839 = vmul.f32 %v837, %v821
        %v840 = vmul.f32 %v837, %v822
        %v841 = vmul.f32 %v837, %v823
        %v842 = vmul.f32 %v837, %v824
        %v843 = vmul.f32 %v837, %v825
        %v844 = vmul.f32 %v837, %v826
        %v845 = vmul.f32 %v837, %v827
        %v846 = vmul.f32 %v837, %v828
        %v847 = vmul.f32 %v837, %v829
        %v848 = vmul.f32 %v837, %v830
        %v849 = vmul.f32 %v837, %v831
        %v850 = vmul.f32 %v837, %v832
        %v851 = vmul.f32 %v837, %v833
        %v852 = vmul.f32 %v837, %v834
        %v853 = vmul.f32 %v837, %v835
        %v854 = vadd.f32 %v838, 0.0
        %v855 = vadd.f32 %v839, 0.0
        %v856 = vadd.f32 %v840, 0.0
        %v857 = vadd.f32 %v841, 0.0
        %v858 = vadd.f32 %v842, 0.0
        %v859 = vadd.f32 %v843, 0.0
        %v860 = vadd.f32 %v844, 0.0
        %v861 = vadd.f32 %v845, 0.0
        %v862 = vadd.f32 %v846, 0.0
        %v863 = vadd.f32 %v847, 0.0
        %v864 = vadd.f32 %v848, 0.0
        %v865 = vadd.f32 %v849, 0.0
        %v866 = vadd.f32 %v850, 0.0
        %v867 = vadd.f32 %v851, 0.0
        %v868 = vadd.f32 %v852, 0.0
        %v869 = vadd.f32 %v853, 0.0
        %v870 = vld [vmem:[#allocation2 + $0x8] sm:$0xff]
        %v871 = vld [vmem:[#allocation2 + $0x10] sm:$0xff]
        %v872 = vld [vmem:[#allocation2 + $0x18] sm:$0xff]
        %v873 = vld [vmem:[#allocation2 + $0x20] sm:$0xff]
        %v874 = vld [vmem:[#allocation2 + $0x28] sm:$0xff]
        %v875 = vld [vmem:[#allocation2 + $0x30] sm:$0xff]
        %v876 = vld [vmem:[#allocation2 + $0x38] sm:$0xff]
        %v877 = vld [vmem:[#allocation2 + $0x40] sm:$0xff]
        %v878 = vld [vmem:[#allocation2 + $0x48] sm:$0xff]
        %v879 = vld [vmem:[#allocation2 + $0x50] sm:$0xff]
        %v880 = vld [vmem:[#allocation2 + $0x58] sm:$0xff]
        %v881 = vld [vmem:[#allocation2 + $0x60] sm:$0xff]
        %v882 = vld [vmem:[#allocation2 + $0x68] sm:$0xff]
        %v883 = vld [vmem:[#allocation2 + $0x70] sm:$0xff]
        %v884 = vld [vmem:[#allocation2 + $0x78] sm:$0xff]
        %v885 = vld [vmem:[#allocation2 + $0x80] sm:$0xff]
        %s886 = sld [smem:[#allocation7 + $0x1]]
        %v887 = vstv %s886
        %v888 = vmul.f32 %v887, %v870
        %v889 = vmul.f32 %v887, %v871
        %v890 = vmul.f32 %v887, %v872
        %v891 = vmul.f32 %v887, %v873
        %v892 = vmul.f32 %v887, %v874
        %v893 = vmul.f32 %v887, %v875
        %v894 = vmul.f32 %v887, %v876
        %v895 = vmul.f32 %v887, %v877
        %v896 = vmul.f32 %v887, %v878
        %v897 = vmul.f32 %v887, %v879
        %v898 = vmul.f32 %v887, %v880
        %v899 = vmul.f32 %v887, %v881
        %v900 = vmul.f32 %v887, %v882
        %v901 = vmul.f32 %v887, %v883
        %v902 = vmul.f32 %v887, %v884
        %v903 = vmul.f32 %v887, %v885
        %v904 = vadd.f32 %v854, %v888
        %v905 = vadd.f32 %v855, %v889
        %v906 = vadd.f32 %v856, %v890
        %v907 = vadd.f32 %v857, %v891
        %v908 = vadd.f32 %v858, %v892
        %v909 = vadd.f32 %v859, %v893
        %v910 = vadd.f32 %v860, %v894
        %v911 = vadd.f32 %v861, %v895
        %v912 = vadd.f32 %v862, %v896
        %v913 = vadd.f32 %v863, %v897
        %v914 = vadd.f32 %v864, %v898
        %v915 = vadd.f32 %v865, %v899
        %v916 = vadd.f32 %v866, %v900
        %v917 = vadd.f32 %v867, %v901
        %v918 = vadd.f32 %v868, %v902
        %v919 = vadd.f32 %v869, %v903
        %v920 = vld [vmem:[#allocation2 + $0x9] sm:$0xff]
        %v921 = vld [vmem:[#allocation2 + $0x11] sm:$0xff]
        %v922 = vld [vmem:[#allocation2 + $0x19] sm:$0xff]
        %v923 = vld [vmem:[#allocation2 + $0x21] sm:$0xff]
        %v924 = vld [vmem:[#allocation2 + $0x29] sm:$0xff]
        %v925 = vld [vmem:[#allocation2 + $0x31] sm:$0xff]
        %v926 = vld [vmem:[#allocation2 + $0x39] sm:$0xff]
        %v927 = vld [vmem:[#allocation2 + $0x41] sm:$0xff]
        %v928 = vld [vmem:[#allocation2 + $0x49] sm:$0xff]
        %v929 = vld [vmem:[#allocation2 + $0x51] sm:$0xff]
        %v930 = vld [vmem:[#allocation2 + $0x59] sm:$0xff]
        %v931 = vld [vmem:[#allocation2 + $0x61] sm:$0xff]
        %v932 = vld [vmem:[#allocation2 + $0x69] sm:$0xff]
        %v933 = vld [vmem:[#allocation2 + $0x71] sm:$0xff]
        %v934 = vld [vmem:[#allocation2 + $0x79] sm:$0xff]
        %v935 = vld [vmem:[#allocation2 + $0x81] sm:$0xff]
        %v936 = vadd.s32 %v724, 1
        %v937 = vadd.s32 %v725, 1
        %v938 = vadd.s32 %v726, 1
        %v939 = vadd.s32 %v727, 1
        %v940 = vadd.s32 %v728, 1
        %v941 = vadd.s32 %v729, 1
        %v942 = vadd.s32 %v730, 1
        %v943 = vadd.s32 %v731, 1
        %v944 = vadd.s32 %v732, 1
        %v945 = vadd.s32 %v733, 1
        %v946 = vadd.s32 %v734, 1
        %v947 = vadd.s32 %v735, 1
        %v948 = vadd.s32 %v736, 1
        %v949 = vadd.s32 %v737, 1
        %v950 = vadd.s32 %v738, 1
        %v951 = vadd.s32 %v739, 1
        %vm952 = vcmp.ge.s32.totalorder %v936, 0
        %vm953 = vcmp.ge.s32.totalorder %v937, 0
        %vm954 = vcmp.ge.s32.totalorder %v938, 0
        %vm955 = vcmp.ge.s32.totalorder %v939, 0
        %vm956 = vcmp.ge.s32.totalorder %v940, 0
        %vm957 = vcmp.ge.s32.totalorder %v941, 0
        %vm958 = vcmp.ge.s32.totalorder %v942, 0
        %vm959 = vcmp.ge.s32.totalorder %v943, 0
        %vm960 = vcmp.ge.s32.totalorder %v944, 0
        %vm961 = vcmp.ge.s32.totalorder %v945, 0
        %vm962 = vcmp.ge.s32.totalorder %v946, 0
        %vm963 = vcmp.ge.s32.totalorder %v947, 0
        %vm964 = vcmp.ge.s32.totalorder %v948, 0
        %vm965 = vcmp.ge.s32.totalorder %v949, 0
        %vm966 = vcmp.ge.s32.totalorder %v950, 0
        %vm967 = vcmp.ge.s32.totalorder %v951, 0
        %vm968 = vcmp.lt.s32.totalorder %v936, 128
        %vm969 = vcmp.lt.s32.totalorder %v937, 128
        %vm970 = vcmp.lt.s32.totalorder %v938, 128
        %vm971 = vcmp.lt.s32.totalorder %v939, 128
        %vm972 = vcmp.lt.s32.totalorder %v940, 128
        %vm973 = vcmp.lt.s32.totalorder %v941, 128
        %vm974 = vcmp.lt.s32.totalorder %v942, 128
        %vm975 = vcmp.lt.s32.totalorder %v943, 128
        %vm976 = vcmp.lt.s32.totalorder %v944, 128
        %vm977 = vcmp.lt.s32.totalorder %v945, 128
        %vm978 = vcmp.lt.s32.totalorder %v946, 128
        %vm979 = vcmp.lt.s32.totalorder %v947, 128
        %vm980 = vcmp.lt.s32.totalorder %v948, 128
        %vm981 = vcmp.lt.s32.totalorder %v949, 128
        %vm982 = vcmp.lt.s32.totalorder %v950, 128
        %vm983 = vcmp.lt.s32.totalorder %v951, 128
        %vm984 = vmand %vm952, %vm968
        %vm985 = vmand %vm953, %vm969
        %vm986 = vmand %vm954, %vm970
        %vm987 = vmand %vm955, %vm971
        %vm988 = vmand %vm956, %vm972
        %vm989 = vmand %vm957, %vm973
        %vm990 = vmand %vm958, %vm974
        %vm991 = vmand %vm959, %vm975
        %vm992 = vmand %vm960, %vm976
        %vm993 = vmand %vm961, %vm977
        %vm994 = vmand %vm962, %vm978
        %vm995 = vmand %vm963, %vm979
        %vm996 = vmand %vm964, %vm980
        %vm997 = vmand %vm965, %vm981
        %vm998 = vmand %vm966, %vm982
        %vm999 = vmand %vm967, %vm983
        %v1000 = vsel %vm984, %v920, 0.0
        %v1001 = vsel %vm985, %v921, 0.0
        %v1002 = vsel %vm986, %v922, 0.0
        %v1003 = vsel %vm987, %v923, 0.0
        %v1004 = vsel %vm988, %v924, 0.0
        %v1005 = vsel %vm989, %v925, 0.0
        %v1006 = vsel %vm990, %v926, 0.0
        %v1007 = vsel %vm991, %v927, 0.0
        %v1008 = vsel %vm992, %v928, 0.0
        %v1009 = vsel %vm993, %v929, 0.0
        %v1010 = vsel %vm994, %v930, 0.0
        %v1011 = vsel %vm995, %v931, 0.0
        %v1012 = vsel %vm996, %v932, 0.0
        %v1013 = vsel %vm997, %v933, 0.0
        %v1014 = vsel %vm998, %v934, 0.0
        %v1015 = vsel %vm999, %v935, 0.0
        %s1016 = sld [smem:[#allocation7 + $0x2]]
        %v1017 = vstv %s1016
        %v1018 = vmul.f32 %v1017, %v1000
        %v1019 = vmul.f32 %v1017, %v1001
        %v1020 = vmul.f32 %v1017, %v1002
        %v1021 = vmul.f32 %v1017, %v1003
        %v1022 = vmul.f32 %v1017, %v1004
        %v1023 = vmul.f32 %v1017, %v1005
        %v1024 = vmul.f32 %v1017, %v1006
        %v1025 = vmul.f32 %v1017, %v1007
        %v1026 = vmul.f32 %v1017, %v1008
        %v1027 = vmul.f32 %v1017, %v1009
        %v1028 = vmul.f32 %v1017, %v1010
        %v1029 = vmul.f32 %v1017, %v1011
        %v1030 = vmul.f32 %v1017, %v1012
        %v1031 = vmul.f32 %v1017, %v1013
        %v1032 = vmul.f32 %v1017, %v1014
        %v1033 = vmul.f32 %v1017, %v1015
        %v1034 = vadd.f32 %v904, %v1018
        %v1035 = vadd.f32 %v905, %v1019
        %v1036 = vadd.f32 %v906, %v1020
        %v1037 = vadd.f32 %v907, %v1021
        %v1038 = vadd.f32 %v908, %v1022
        %v1039 = vadd.f32 %v909, %v1023
        %v1040 = vadd.f32 %v910, %v1024
        %v1041 = vadd.f32 %v911, %v1025
        %v1042 = vadd.f32 %v912, %v1026
        %v1043 = vadd.f32 %v913, %v1027
        %v1044 = vadd.f32 %v914, %v1028
        %v1045 = vadd.f32 %v915, %v1029
        %v1046 = vadd.f32 %v916, %v1030
        %v1047 = vadd.f32 %v917, %v1031
        %v1048 = vadd.f32 %v918, %v1032
        %v1049 = vadd.f32 %v919, %v1033
        %v1050 = vsub.f32 0.0, %v1034
        %v1051 = vsub.f32 0.0, %v1035
        %v1052 = vsub.f32 0.0, %v1036
        %v1053 = vsub.f32 0.0, %v1037
        %v1054 = vsub.f32 0.0, %v1038
        %v1055 = vsub.f32 0.0, %v1039
        %v1056 = vsub.f32 0.0, %v1040
        %v1057 = vsub.f32 0.0, %v1041
        %v1058 = vsub.f32 0.0, %v1042
        %v1059 = vsub.f32 0.0, %v1043
        %v1060 = vsub.f32 0.0, %v1044
        %v1061 = vsub.f32 0.0, %v1045
        %v1062 = vsub.f32 0.0, %v1046
        %v1063 = vsub.f32 0.0, %v1047
        %v1064 = vsub.f32 0.0, %v1048
        %v1065 = vsub.f32 0.0, %v1049
        %v1066 = vmul.f32 %v1050, 1.442695
        %v1067 = vpow.pop %v1066
        %v1068 = vmul.f32 %v1051, 1.442695
        %v1069 = vpow.pop %v1068
        %v1070 = vmul.f32 %v1052, 1.442695
        %v1071 = vpow.pop %v1070
        %v1072 = vmul.f32 %v1053, 1.442695
        %v1073 = vpow.pop %v1072
        %v1074 = vmul.f32 %v1054, 1.442695
        %v1075 = vpow.pop %v1074
        %v1076 = vmul.f32 %v1055, 1.442695
        %v1077 = vpow.pop %v1076
        %v1078 = vmul.f32 %v1056, 1.442695
        %v1079 = vpow.pop %v1078
        %v1080 = vmul.f32 %v1057, 1.442695
        %v1081 = vpow.pop %v1080
        %v1082 = vmul.f32 %v1058, 1.442695
        %v1083 = vpow.pop %v1082
        %v1084 = vmul.f32 %v1059, 1.442695
        %v1085 = vpow.pop %v1084
        %v1086 = vmul.f32 %v1060, 1.442695
        %v1087 = vpow.pop %v1086
        %v1088 = vmul.f32 %v1061, 1.442695
        %v1089 = vpow.pop %v1088
        %v1090 = vmul.f32 %v1062, 1.442695
        %v1091 = vpow.pop %v1090
        %v1092 = vmul.f32 %v1063, 1.442695
        %v1093 = vpow.pop %v1092
        %v1094 = vmul.f32 %v1064, 1.442695
        %v1095 = vpow.pop %v1094
        %v1096 = vmul.f32 %v1065, 1.442695
        %v1097 = vpow.pop %v1096
        %v1098 = vadd.f32 %v1067, 1.0
        %v1099 = vadd.f32 %v1069, 1.0
        %v1100 = vadd.f32 %v1071, 1.0
        %v1101 = vadd.f32 %v1073, 1.0
        %v1102 = vadd.f32 %v1075, 1.0
        %v1103 = vadd.f32 %v1077, 1.0
        %v1104 = vadd.f32 %v1079, 1.0
        %v1105 = vadd.f32 %v1081, 1.0
        %v1106 = vadd.f32 %v1083, 1.0
        %v1107 = vadd.f32 %v1085, 1.0
        %v1108 = vadd.f32 %v1087, 1.0
        %v1109 = vadd.f32 %v1089, 1.0
        %v1110 = vadd.f32 %v1091, 1.0
        %v1111 = vadd.f32 %v1093, 1.0
        %v1112 = vadd.f32 %v1095, 1.0
        %v1113 = vadd.f32 %v1097, 1.0
        %v1114 = vrcp.pop %v1098
        %v1115 = vmul.f32 1.0, %v1114
        %v1116 = vrcp.pop %v1099
        %v1117 = vmul.f32 1.0, %v1116
        %v1118 = vrcp.pop %v1100
        %v1119 = vmul.f32 1.0, %v1118
        %v1120 = vrcp.pop %v1101
        %v1121 = vmul.f32 1.0, %v1120
        %v1122 = vrcp.pop %v1102
        %v1123 = vmul.f32 1.0, %v1122
        %v1124 = vrcp.pop %v1103
        %v1125 = vmul.f32 1.0, %v1124
        %v1126 = vrcp.pop %v1104
        %v1127 = vmul.f32 1.0, %v1126
        %v1128 = vrcp.pop %v1105
        %v1129 = vmul.f32 1.0, %v1128
        %v1130 = vrcp.pop %v1106
        %v1131 = vmul.f32 1.0, %v1130
        %v1132 = vrcp.pop %v1107
        %v1133 = vmul.f32 1.0, %v1132
        %v1134 = vrcp.pop %v1108
        %v1135 = vmul.f32 1.0, %v1134
        %v1136 = vrcp.pop %v1109
        %v1137 = vmul.f32 1.0, %v1136
        %v1138 = vrcp.pop %v1110
        %v1139 = vmul.f32 1.0, %v1138
        %v1140 = vrcp.pop %v1111
        %v1141 = vmul.f32 1.0, %v1140
        %v1142 = vrcp.pop %v1112
        %v1143 = vmul.f32 1.0, %v1142
        %v1144 = vrcp.pop %v1113
        %v1145 = vmul.f32 1.0, %v1144
        %1147 = vset.pattern.permute.xlu0 0
        %1148 = vperm.xlu0 %1147, %v1115
        %v1149 = vpop.permute.xlu0 %1148
        %1152 = vset.pattern.permute.xlu0 0
        %1153 = vperm.xlu0 %1152, %v1117
        %v1154 = vpop.permute.xlu0 %1153
        %1157 = vset.pattern.permute.xlu0 0
        %1158 = vperm.xlu0 %1157, %v1119
        %v1159 = vpop.permute.xlu0 %1158
        %1162 = vset.pattern.permute.xlu0 0
        %1163 = vperm.xlu0 %1162, %v1121
        %v1164 = vpop.permute.xlu0 %1163
        %1167 = vset.pattern.permute.xlu0 0
        %1168 = vperm.xlu0 %1167, %v1123
        %v1169 = vpop.permute.xlu0 %1168
        %1172 = vset.pattern.permute.xlu0 0
        %1173 = vperm.xlu0 %1172, %v1125
        %v1174 = vpop.permute.xlu0 %1173
        %1177 = vset.pattern.permute.xlu0 0
        %1178 = vperm.xlu0 %1177, %v1127
        %v1179 = vpop.permute.xlu0 %1178
        %1182 = vset.pattern.permute.xlu0 0
        %1183 = vperm.xlu0 %1182, %v1129
        %v1184 = vpop.permute.xlu0 %1183
        %1187 = vset.pattern.permute.xlu0 0
        %1188 = vperm.xlu0 %1187, %v1131
        %v1189 = vpop.permute.xlu0 %1188
        %1192 = vset.pattern.permute.xlu0 0
        %1193 = vperm.xlu0 %1192, %v1133
        %v1194 = vpop.permute.xlu0 %1193
        %1197 = vset.pattern.permute.xlu0 0
        %1198 = vperm.xlu0 %1197, %v1135
        %v1199 = vpop.permute.xlu0 %1198
        %1202 = vset.pattern.permute.xlu0 0
        %1203 = vperm.xlu0 %1202, %v1137
        %v1204 = vpop.permute.xlu0 %1203
        %1207 = vset.pattern.permute.xlu0 0
        %1208 = vperm.xlu0 %1207, %v1139
        %v1209 = vpop.permute.xlu0 %1208
        %1212 = vset.pattern.permute.xlu0 0
        %1213 = vperm.xlu0 %1212, %v1141
        %v1214 = vpop.permute.xlu0 %1213
        %1217 = vset.pattern.permute.xlu0 0
        %1218 = vperm.xlu0 %1217, %v1143
        %v1219 = vpop.permute.xlu0 %1218
        %1222 = vset.pattern.permute.xlu0 0
        %1223 = vperm.xlu0 %1222, %v1145
        %v1224 = vpop.permute.xlu0 %1223
        %v1226 = vmul.f32 %v268, %v1149
        %v1227 = vmul.f32 %v269, %v1149
        %v1228 = vmul.f32 %v270, %v1154
        %v1229 = vmul.f32 %v271, %v1154
        %v1230 = vmul.f32 %v272, %v1159
        %v1231 = vmul.f32 %v273, %v1159
        %v1232 = vmul.f32 %v274, %v1164
        %v1233 = vmul.f32 %v275, %v1164
        %v1234 = vmul.f32 %v276, %v1169
        %v1235 = vmul.f32 %v277, %v1169
        %v1236 = vmul.f32 %v278, %v1174
        %v1237 = vmul.f32 %v279, %v1174
        %v1238 = vmul.f32 %v280, %v1179
        %v1239 = vmul.f32 %v281, %v1179
        %v1240 = vmul.f32 %v282, %v1184
        %v1241 = vmul.f32 %v283, %v1184
        %v1242 = vmul.f32 %v284, %v1189
        %v1243 = vmul.f32 %v285, %v1189
        %v1244 = vmul.f32 %v286, %v1194
        %v1245 = vmul.f32 %v287, %v1194
        %v1246 = vmul.f32 %v288, %v1199
        %v1247 = vmul.f32 %v289, %v1199
        %v1248 = vmul.f32 %v290, %v1204
        %v1249 = vmul.f32 %v291, %v1204
        %v1250 = vmul.f32 %v292, %v1209
        %v1251 = vmul.f32 %v293, %v1209
        %v1252 = vmul.f32 %v294, %v1214
        %v1253 = vmul.f32 %v295, %v1214
        %v1254 = vmul.f32 %v296, %v1219
        %v1255 = vmul.f32 %v297, %v1219
        %v1256 = vmul.f32 %v298, %v1224
        %v1257 = vmul.f32 %v299, %v1224
        %1258 = vst [vmem:[%s259] sm:$0xff] %v1226
        %1259 = vst [vmem:[%s259 + $0x8] sm:$0xff] %v1227
        %1260 = vst [vmem:[%s259 + $0x10] sm:$0xff] %v1228
        %1261 = vst [vmem:[%s259 + $0x18] sm:$0xff] %v1229
        %1262 = vst [vmem:[%s259 + $0x20] sm:$0xff] %v1230
        %1263 = vst [vmem:[%s259 + $0x28] sm:$0xff] %v1231
        %1264 = vst [vmem:[%s259 + $0x30] sm:$0xff] %v1232
        %1265 = vst [vmem:[%s259 + $0x38] sm:$0xff] %v1233
        %1266 = vst [vmem:[%s259 + $0x40] sm:$0xff] %v1234
        %1267 = vst [vmem:[%s259 + $0x48] sm:$0xff] %v1235
        %1268 = vst [vmem:[%s259 + $0x50] sm:$0xff] %v1236
        %1269 = vst [vmem:[%s259 + $0x58] sm:$0xff] %v1237
        %1270 = vst [vmem:[%s259 + $0x60] sm:$0xff] %v1238
        %1271 = vst [vmem:[%s259 + $0x68] sm:$0xff] %v1239
        %1272 = vst [vmem:[%s259 + $0x70] sm:$0xff] %v1240
        %1273 = vst [vmem:[%s259 + $0x78] sm:$0xff] %v1241
        %1274 = vst [vmem:[%s259 + $0x80] sm:$0xff] %v1242
        %1275 = vst [vmem:[%s259 + $0x88] sm:$0xff] %v1243
        %1276 = vst [vmem:[%s259 + $0x90] sm:$0xff] %v1244
        %1277 = vst [vmem:[%s259 + $0x98] sm:$0xff] %v1245
        %1278 = vst [vmem:[%s259 + $0xa0] sm:$0xff] %v1246
        %1279 = vst [vmem:[%s259 + $0xa8] sm:$0xff] %v1247
        %1280 = vst [vmem:[%s259 + $0xb0] sm:$0xff] %v1248
        %1281 = vst [vmem:[%s259 + $0xb8] sm:$0xff] %v1249
        %1282 = vst [vmem:[%s259 + $0xc0] sm:$0xff] %v1250
        %1283 = vst [vmem:[%s259 + $0xc8] sm:$0xff] %v1251
        %1284 = vst [vmem:[%s259 + $0xd0] sm:$0xff] %v1252
        %1285 = vst [vmem:[%s259 + $0xd8] sm:$0xff] %v1253
        %1286 = vst [vmem:[%s259 + $0xe0] sm:$0xff] %v1254
        %1287 = vst [vmem:[%s259 + $0xe8] sm:$0xff] %v1255
        %1288 = vst [vmem:[%s259 + $0xf0] sm:$0xff] %v1256
        %1289 = vst [vmem:[%s259 + $0xf8] sm:$0xff] %v1257
        %s1290 = sand.u32 %s125, 1
        %s1291 = scalar_lea.sflag [#allocation5], %s1290
        %s1292 = sand.u32 %s125, 1
        %s1293 = smul.addr %s1292, 256
        %s1294 = scalar_lea.vmem [#allocation10], %s1293
        // Predicated region
        $region49: #{tpu_custom_call.1} parent=35 // pred_check
          %p1295 = pneg %p135
        $region50: #{tpu_custom_call.1} parent=35 // pred_check_branch
          %1297 = sbr.rel (%p1295) target = $region52
        $region51: #{tpu_custom_call.1} parent=35 // pred_region
          %s1298 = smul.u32 16, %s23
          %s1300 = ssub.s32 4096, 4096
          %1301 = vsyncadd %s1291, %s1300
          %s1302 = smul.addr %s1298, 2
          %s1303 = smul.addr %s1302, 128
          %s1304 = scalar_lea.hbm %s4, %s1303
          %s1305 = sshll.u32 %s1294, 4
          %s1306 = int_to_ptr.vmem [resolvable:$true] %s1305
          %1311 = dma.vmem_to_hbm [thread:$0]  %s1306, 4096, %s1304, %s1291, 256, 256, 16
        $region52: #{tpu_custom_call.1} parent=35 // pred_fallthru
          _
      $region36: #{tpu_custom_call.1} parent=5 // pred_fallthru
        _
      %p1312 = scmp.le.s32.totalorder 2, %s18
      // Predicated region
      $region53: #{tpu_custom_call.1} parent=5 // pred_check
        %p1313 = pneg %p1312
      $region54: #{tpu_custom_call.1} parent=5 // pred_check_branch
        %1315 = sbr.rel (%p1313) target = $region56
      $region55: #{tpu_custom_call.1} parent=5 // pred_region
        %s1316 = ssub.s32 %s18, 2
        // Predicated region
        $region57: #{tpu_custom_call.1} parent=55 // pred_check
          %p1317 = pneg %p141
        $region58: #{tpu_custom_call.1} parent=55 // pred_check_branch
          %1319 = sbr.rel (%p1317) target = $region60
        $region59: #{tpu_custom_call.1} parent=55 // pred_region
          %s1320 = sand.u32 %s126, 1
          %s1321 = scalar_lea.sflag [#allocation5], %s1320
          %s1322 = sand.u32 %s126, 1
          %s1323 = smul.addr %s1322, 256
          %s1324 = scalar_lea.vmem [#allocation10], %s1323
          %1325 = dma.done %s1321, 4096
        $region60: #{tpu_custom_call.1} parent=55 // pred_fallthru
          _
      $region56: #{tpu_custom_call.1} parent=5 // pred_fallthru
        _
    $region6: #{tpu_custom_call.1} parent=1 // loop_footer
      %s22 = sadd.s32 1, %s18
    $region7: #{tpu_custom_call.1} parent=1 // loop_footer_branch
      %17 = sbr.rel target = $region3
    $region8: #{tpu_custom_call.1} parent=1 // loop_exit
      _
    %1326 = vsyncpa [#allocation4], 1
    %s1327 = scalar_lea.sflag [#allocation4], 1
    %1328 = vsyncpa %s1327, 1
    %1329 = vsyncpa [#allocation5], 1
    %s1330 = scalar_lea.sflag [#allocation5], 1
    %1331 = vsyncpa %s1330, 1
    %1332 = vsyncpa [#allocation6], 1
    %s1333 = scalar_lea.sflag [#allocation6], 1
    %1334 = vsyncpa %s1333, 1
    %1335 = vsyncpa [#allocation8], 1

</llo_original>
